<compile_context>
chip_gen: v5e
topology: v5e:2x2
jax: 0.10.0
libtpu: 0.0.40
codegen_flags: <defaults>
</compile_context>

<pallas_src>
import functools
import math

import jax
import jax.numpy as jnp
from jax.experimental import pallas as pl
from jax.experimental.pallas import tpu as pltpu


def _token_embed_kernel(x_ref, w_ref, o_ref, *, seq_len):
    """One row-tile of the circular conv, as a single fused matmul.

    x_ref: (TM, c_in)          TM = TB * seq_len rows (TB whole sequences)
    w_ref: (3*c_in, d_model)   fused taps, rows ordered prev | mid | next
    o_ref: (TM, d_model)
    """
    L = seq_len
    x = x_ref[...]
    m = x.shape[0]

    if L == 1:
        # Degenerate circular conv: every tap sees the same (only) row.
        prev_x = x
        next_x = x
    else:
        # The block holds whole sequences back-to-back, so position within a
        # sequence is (row % L).  A global sublane roll gives the correct
        # neighbour for every interior row; sequence-boundary rows are fixed up
        # with a second roll that reaches the other end of the *same* sequence.
        # pltpu.roll follows jnp.roll semantics: out[r] = in[(r - shift) % m].
        row = jax.lax.broadcasted_iota(jnp.int32, (m, 1), 0)
        lpos = row % L
        prev_x = jnp.where(
            lpos == 0,
            pltpu.roll(x, shift=m - L + 1, axis=0),  # row -> row + (L-1)
            pltpu.roll(x, shift=1, axis=0),          # row -> row - 1
        )
        next_x = jnp.where(
            lpos == L - 1,
            pltpu.roll(x, shift=L - 1, axis=0),      # row -> row - (L-1)
            pltpu.roll(x, shift=m - 1, axis=0),      # row -> row + 1
        )

    # Fused taps: one MXU contraction over K = 3*c_in, no VMEM accumulator
    # round-trips.
    x_taps = jnp.concatenate([prev_x, x, next_x], axis=-1)   # (TM, 3*c_in)
    o_ref[...] = jnp.dot(
        x_taps, w_ref[...], preferred_element_type=jnp.float32
    ).astype(o_ref.dtype)


def prepare_conv_weight(weight):
    """(d_model, c_in, 3) PyTorch Conv1d weight -> fused (3*c_in, d_model).

    Do this ONCE at parameter-load time (hoisted out of the forward path).
    Row k*c_in + c  ==  weight[:, c, k];  k = 0: prev tap, 1: centre, 2: next,
    matching the in-kernel concat order [prev_x | x | next_x].
    """
    d_model, c_in, k = weight.shape
    assert k == 3, "TokenEmbedding uses kernel_size=3"
    return jnp.transpose(weight, (2, 1, 0)).reshape(3 * c_in, d_model)


def _pick_batch_tile(batch, seq_len, target_rows, vmem_budget, bytes_fn):
    """Whole sequences per block.

    Requires (tb * L) % 8 == 0 (sublane alignment); tb need NOT divide B — the
    grid uses cdiv and the last block may be partial (it still holds only whole
    sequences, so the circular-shift logic stays correct and padded rows'
    outputs are discarded).  Keeps >= 2 grid steps when possible (v7x 2-TC
    sharding) and shrinks the tile to fit the VMEM budget.
    """
    g = 8 // math.gcd(seq_len, 8)           # smallest tb with (tb*L) % 8 == 0
    if g > batch:
        return batch                        # only the full-array block is legal
    tb = max(g, (min(batch, max(g, target_rows // seq_len)) // g) * g)
    if batch >= 2 * g:
        # Cap so the grid has >= 2 steps -> both TensorCores busy on v7x.
        half = max(g, (((batch + 1) // 2) // g) * g)
        tb = min(tb, half)
    while tb > g and bytes_fn(tb * seq_len) > vmem_budget:
        tb -= g
    return tb


def token_embedding(x, w_fused, *, out_dtype=None, compute_dtype=None,
                    block_rows=1024, vmem_budget_bytes=40 * 1024 * 1024):
    """Circular Conv1d(c_in -> d_model, k=3, pad=1, bias=False), channels-last.

    x:       (B, L, c_in)
    w_fused: (3*c_in, d_model)  from prepare_conv_weight()
    returns  (B, L, d_model)

    out_dtype: the kernel is output-write bound (d_model >> c_in), so
      out_dtype=jnp.bfloat16 roughly halves wall-clock on all generations when
      the consumer tolerates bf16.  Default keeps x.dtype (f32) to match the
      PyTorch module exactly.
    compute_dtype: casting inputs to bf16 buys almost nothing (input traffic is
      tiny) and adds conversion work on v5e; leave None unless profiled.
    block_rows / vmem_budget_bytes: the default 1024-row tile with a 40 MiB
      double-buffered budget fits v7x's 64 MiB physical VMEM; the tile auto-
      shrinks for larger d_model.  v5e/v6e (128 MiB physical) can raise both.
    """
    B, L, c_in = x.shape
    kc, d_model = w_fused.shape
    assert kc == 3 * c_in, "w_fused must come from prepare_conv_weight()"

    if out_dtype is None:
        out_dtype = x.dtype
    if compute_dtype is not None:
        x = x.astype(compute_dtype)
        w_fused = w_fused.astype(compute_dtype)

    x_bytes = jnp.dtype(x.dtype).itemsize
    w_bytes = jnp.dtype(w_fused.dtype).itemsize
    o_bytes = jnp.dtype(out_dtype).itemsize

    def est_bytes(tm):
        pad_l = lambda n: -(-n // 128) * 128     # lane padding
        pad_s = lambda n: -(-n // 8) * 8         # sublane padding
        xb = tm * pad_l(c_in) * x_bytes
        wb = pad_s(3 * c_in) * pad_l(d_model) * w_bytes
        ob = tm * pad_l(d_model) * o_bytes
        return 2 * (xb + wb + ob)                # double-buffered pipeline

    tb = _pick_batch_tile(B, L, block_rows, vmem_budget_bytes, est_bytes)
    tm = tb * L
    m_total = B * L
    grid = pl.cdiv(B, tb)

    est = est_bytes(tm)
    vmem_limit = int(max(32 << 20,
                         min(48 << 20, 1.25 * est + (1 << 20)),
                         est + (2 << 20)))

    # Free, contiguous reshape in XLA (no extra HBM traffic).
    x2 = x.reshape(m_total, c_in)

    # TODO(synk): if d_model < 128 the output store is lane-sparse (masked vst);
    # if it binds, fuse this kernel with its consumer rather than shrinking tiles.
    out = pl.pallas_call(
        functools.partial(_token_embed_kernel, seq_len=L),
        out_shape=jax.ShapeDtypeStruct((m_total, d_model), out_dtype),
        grid_spec=pltpu.PrefetchScalarGridSpec(
            num_scalar_prefetch=0,
            grid=(grid,),
            in_specs=[
                pl.BlockSpec((tm, c_in), lambda i: (i, 0)),
                # Fused tap weights: same block every step -> VMEM-resident.
                pl.BlockSpec((3 * c_in, d_model), lambda i: (0, 0)),
            ],
            out_specs=pl.BlockSpec((tm, d_model), lambda i: (i, 0)),
        ),
        compiler_params=pltpu.CompilerParams(
            # Row tiles are independent -> megacore / 2-TC sharding on v7x.
            dimension_semantics=("parallel",),
            vmem_limit_bytes=vmem_limit,
        ),
    )(x2, w_fused)
    return out.reshape(B, L, d_model)


def _reference(x, weight):
    """Pure-JAX reference: Conv1d(k=3, circular pad=1, no bias), channels-last."""
    x_prev = jnp.roll(x, 1, axis=1)
    x_next = jnp.roll(x, -1, axis=1)
    return (jnp.einsum('blc,mc->blm', x_prev, weight[:, :, 0])
            + jnp.einsum('blc,mc->blm', x, weight[:, :, 1])
            + jnp.einsum('blc,mc->blm', x_next, weight[:, :, 2]))


if __name__ == "__main__":
    key = jax.random.PRNGKey(0)
    kx, kw, kx2, kw2, kx3 = jax.random.split(key, 5)

    # --- primary check: small shapes implied by the module -------------------
    B, L, c_in, d_model = 2, 8, 4, 32
    x = jax.random.normal(kx, (B, L, c_in), dtype=jnp.float32)

    # Deterministic Kaiming-normal init (fan_in mode, leaky_relu gain) for the
    # Conv1d weight of shape (d_model, c_in, kernel_size=3).
    fan_in = c_in * 3
    gain = (2.0 / (1.0 + 0.01 ** 2)) ** 0.5
    std = gain / (fan_in ** 0.5)
    weight = std * jax.random.normal(kw, (d_model, c_in, 3), dtype=jnp.float32)

    w_fused = prepare_conv_weight(weight)        # hoisted weight re-layout
    out = jax.block_until_ready(token_embedding(x, w_fused))
    ref = _reference(x, weight)
    assert out.shape == (B, L, d_model)
    assert jnp.allclose(out, ref, atol=1e-5, rtol=1e-5)

    # --- multi-block check: several sequences per block, several grid steps --
    B2, L2, c2, d2 = 6, 8, 4, 128
    x_b = jax.random.normal(kx2, (B2, L2, c2), dtype=jnp.float32)
    w_b = (1.0 / (3 * c2) ** 0.5) * jax.random.normal(
        kw2, (d2, c2, 3), dtype=jnp.float32)
    w_b_fused = prepare_conv_weight(w_b)
    out_b = jax.block_until_ready(
        token_embedding(x_b, w_b_fused, block_rows=16))   # tb=2 -> grid=(3,)
    ref_b = _reference(x_b, w_b)
    assert jnp.allclose(out_b, ref_b, atol=1e-5, rtol=1e-5)

    # --- partial-last-block check: tb does not divide B (cdiv grid) ----------
    B3 = 5
    x_c = jax.random.normal(kx3, (B3, L2, c2), dtype=jnp.float32)
    out_c = jax.block_until_ready(
        token_embedding(x_c, w_b_fused, block_rows=16))   # tb=2 -> grid=(3,), last partial
    ref_c = _reference(x_c, w_b)
    assert jnp.allclose(out_c, ref_c, atol=1e-5, rtol=1e-5)

    # --- bf16 output path (halves the binding HBM write traffic) -------------
    out_bf16 = jax.block_until_ready(
        token_embedding(x, w_fused, out_dtype=jnp.bfloat16))
    assert out_bf16.dtype == jnp.bfloat16
    assert jnp.allclose(out_bf16.astype(jnp.float32), ref, atol=2e-2, rtol=2e-2)

    print("KERNEL_OK")
</pallas_src>

<mosaic_0001>
module attributes {stable_mosaic.version = 11 : i64} {
  func.func @_token_embed_kernel(%arg0: i32, %arg1: memref<8x4xf32, #tpu.memory_space<vmem>>, %arg2: memref<12x32xf32, #tpu.memory_space<vmem>>, %arg3: memref<8x32xf32, #tpu.memory_space<vmem>>) attributes {dimension_semantics = [#tpu.dimension_semantics<parallel>], iteration_bounds = array<i64: 2>, scalar_prefetch = 0 : i64, scratch_operands = 0 : i64, tpu.core_type = #tpu.core_type<tc>, window_params = [{transform_indices = @transform_0, window_bounds = array<i64: 8, 4>}, {pipeline_mode = #tpu.pipeline_mode<synchronous>, transform_indices = @transform_1, window_bounds = array<i64: 12, 32>}, {transform_indices = @transform_2, window_bounds = array<i64: 8, 32>}]} {
    %c0 = arith.constant 0 : index
    %c0_0 = arith.constant 0 : index
    %0 = vector.load %arg1[%c0, %c0_0] : memref<8x4xf32, #tpu.memory_space<vmem>>, vector<8x4xf32>
    %1 = tpu.iota {dimensions = array<i32: 0>} : vector<8x1xi32>
    %c8_i32 = arith.constant 8 : i32
    %c0_i32 = arith.constant 0 : i32
    %2 = arith.cmpi eq, %c8_i32, %c0_i32 : i32
    %c1_i32 = arith.constant 1 : i32
    %3 = arith.select %2, %c1_i32, %c8_i32 : i32
    %4 = vector.broadcast %3 : i32 to vector<8x1xi32>
    %5 = arith.remsi %1, %4 : vector<8x1xi32>
    %c0_i32_1 = arith.constant 0 : i32
    %6 = vector.broadcast %c0_i32_1 : i32 to vector<8x1xi32>
    %7 = arith.cmpi ne, %5, %6 : vector<8x1xi32>
    %c0_i32_2 = arith.constant 0 : i32
    %8 = vector.broadcast %c0_i32_2 : i32 to vector<8x1xi32>
    %9 = arith.cmpi slt, %5, %8 : vector<8x1xi32>
    %c0_i32_3 = arith.constant 0 : i32
    %10 = arith.cmpi slt, %3, %c0_i32_3 : i32
    %11 = vector.broadcast %10 : i1 to vector<8x1xi1>
    %12 = vector.broadcast %11 : vector<8x1xi1> to vector<8x1xi1>
    %13 = arith.xori %9, %12 : vector<8x1xi1>
    %14 = arith.andi %13, %7 : vector<8x1xi1>
    %15 = vector.broadcast %3 : i32 to vector<8x1xi32>
    %16 = arith.addi %5, %15 : vector<8x1xi32>
    %17 = arith.select %14, %16, %5 : vector<8x1xi1>, vector<8x1xi32>
    %c0_i32_4 = arith.constant 0 : i32
    %18 = vector.broadcast %c0_i32_4 : i32 to vector<8x1xi32>
    %19 = arith.cmpi eq, %17, %18 : vector<8x1xi32>
    %c1_i32_5 = arith.constant 1 : i32
    %20 = tpu.dynamic_rotate %0 by %c1_i32_5 dim 0 : vector<8x4xf32>, i32 -> vector<8x4xf32>
    %c1_i32_6 = arith.constant 1 : i32
    %21 = tpu.dynamic_rotate %0 by %c1_i32_6 dim 0 : vector<8x4xf32>, i32 -> vector<8x4xf32>
    %22 = vector.shape_cast %19 : vector<8x1xi1> to vector<8x1xi1>
    %23 = vector.broadcast %22 : vector<8x1xi1> to vector<8x4xi1>
    %24 = arith.select %23, %20, %21 : vector<8x4xi1>, vector<8x4xf32>
    %c7_i32 = arith.constant 7 : i32
    %25 = vector.broadcast %c7_i32 : i32 to vector<8x1xi32>
    %26 = arith.cmpi eq, %17, %25 : vector<8x1xi32>
    %c7_i32_7 = arith.constant 7 : i32
    %27 = tpu.dynamic_rotate %0 by %c7_i32_7 dim 0 : vector<8x4xf32>, i32 -> vector<8x4xf32>
    %c7_i32_8 = arith.constant 7 : i32
    %28 = tpu.dynamic_rotate %0 by %c7_i32_8 dim 0 : vector<8x4xf32>, i32 -> vector<8x4xf32>
    %29 = vector.shape_cast %26 : vector<8x1xi1> to vector<8x1xi1>
    %30 = vector.broadcast %29 : vector<8x1xi1> to vector<8x4xi1>
    %31 = arith.select %30, %27, %28 : vector<8x4xi1>, vector<8x4xf32>
    %32 = tpu.concatenate %24, %0, %31 in 1 : vector<8x4xf32>, vector<8x4xf32>, vector<8x4xf32> -> vector<8x12xf32>
    %c0_9 = arith.constant 0 : index
    %c0_10 = arith.constant 0 : index
    %33 = vector.load %arg2[%c0_9, %c0_10] : memref<12x32xf32, #tpu.memory_space<vmem>>, vector<12x32xf32>
    %cst = arith.constant dense<0.000000e+00> : vector<8x32xf32>
    %34 = tpu.matmul %32, %33, %cst {dimension_numbers = #tpu.dot_dimension_numbers<[1], [0], [0], [1], [0, 0, 1, 1], [], []>} : vector<8x12xf32>, vector<12x32xf32>, vector<8x32xf32> -> vector<8x32xf32>
    %c0_11 = arith.constant 0 : index
    %c0_12 = arith.constant 0 : index
    %35 = vector.load %arg3[%c0_11, %c0_12] : memref<8x32xf32, #tpu.memory_space<vmem>>, vector<8x32xf32>
    tpu.vector_store %arg3[%c0_11, %c0_12], %34 {strides = array<i32>} : memref<8x32xf32, #tpu.memory_space<vmem>>, vector<8x32xf32>,
    return
  }
  func.func @transform_0(%arg0: i32) -> (i32, i32) {
    %c0_i32 = arith.constant 0 : i32
    %c0_i32_0 = arith.constant 0 : i32
    return %arg0, %c0_i32 : i32, i32
  }
  func.func @transform_1(%arg0: i32) -> (i32, i32) {
    %c0_i32 = arith.constant 0 : i32
    %c0_i32_0 = arith.constant 0 : i32
    %c0_i32_1 = arith.constant 0 : i32
    return %c0_i32, %c0_i32_0 : i32, i32
  }
  func.func @transform_2(%arg0: i32) -> (i32, i32) {
    %c0_i32 = arith.constant 0 : i32
    %c0_i32_0 = arith.constant 0 : i32
    return %arg0, %c0_i32 : i32, i32
  }
}

</mosaic_0001>

<llo_original>
// kernel: tpu_custom_call.1
$region0: #{tpu_custom_call.1}
  #allocation0 [shape = 'u32[]', space=smem, size = 0x4, offset = 0x4, fixed_abs, tag = 'smem constant byte address 0x4 - core index']
  #allocation1 [shape = 'u32[72,128]{1,0:T(1,128)}', space=vmem, size = 0x9000, scoped, tag = 'internal scratch']
  %s0 = inlined_call_operand.vmem [shape: f32[16,4], index: 0, kind: input, shape index: {}]
  %s1 = inlined_call_operand.vmem [shape: f32[12,32], index: 1, kind: input, shape index: {}]
  %s2 = inlined_call_operand.hbm [shape: f32[16,32], index: 2, kind: output, shape index: {}]
  %s3 = sld [smem:[#allocation0]]
  $region41: #{tpu_custom_call.1} parent=0
    _
  %s5 = ssub.s32 1, %s3
  %s6 = scalar_select 0, %s5, %s3
  $region1: #{tpu_custom_call.1} parent=0
    #allocation2 [shape = 'u8[8192]{0}', space=vmem, size = 0x2000, scoped, tag = 'output window, operand 0']
    #allocation3 [shape = 's32[2]{0}', space=sflag, size = 0x8, scoped, tag = 'scoped memory for tpu_custom_call.1']
    %7 = vsyncpa [#allocation3], 0
    %s8 = scalar_lea.sflag [#allocation3], 1
    %9 = vsyncpa %s8, 0
    loop: start=0, step=1, limit=4
    $region2: #{tpu_custom_call.1} parent=1 // loop_pre_header
      _
    $region3: #{tpu_custom_call.1} parent=1 // loop_header
      %s11 = sphi 0, %s15
      %p12 = scmp.ge.s32.totalorder %s11, 4
      %s21 = sphi 0, %s23
      %s24 = sphi 0, %s21
      %s25 = sphi 0, %s24
      %s41 = sphi 0, %s25
      %s45 = sphi 0, %s45
      %s47 = sphi 0, %s45
      %s48 = sphi 0, %s47
      %s62 = sphi 0, %s48
      %s68 = sphi 0, %s70
      %s71 = sphi 0, %s68
      %s72 = sphi 0, %s71
      %s88 = sphi 0, %s72
    $region4: #{tpu_custom_call.1} parent=1 // loop_header_branch
      %14 = sbr.rel (%p12) target = $region8
    $region5: #{tpu_custom_call.1} parent=1 // loop_body
      %s16 = ssub.s32 %s11, 1
      %s17 = ssub.s32 %s11, 2
      %s18 = sadd.s32 %s11, 1
      %s19 = ssub.s32 %s11, %s18
      %p20 = scmp.eq.s32.totalorder %s19, 0
      %s22 = sadd.s32 %s21, 1
      %s23 = scalar_select %p20, %s21, %s22
      %p26 = pneg %p20
      %p27 = scmp.eq.s32.totalorder %s11, 1
      %p28 = por %p26, %p27
      %p29 = scmp.ne.s32.totalorder %s21, %s24
      %p30 = scmp.eq.s32.totalorder %s11, 0
      %p31 = por %p29, %p30
      %p32 = scmp.ne.s32.totalorder %s21, %s24
      %p33 = scmp.eq.s32.totalorder %s16, 1
      %p34 = por %p32, %p33
      %p35 = scmp.ne.s32.totalorder %s24, %s25
      %p36 = scmp.eq.s32.totalorder %s16, 0
      %p37 = por %p35, %p36
      %p38 = scmp.ne.s32.totalorder %s24, %s25
      %p39 = scmp.eq.s32.totalorder %s17, 1
      %p40 = por %p38, %p39
      %p42 = scmp.ne.s32.totalorder %s25, %s41
      %p43 = scmp.eq.s32.totalorder %s17, 0
      %p44 = por %p42, %p43
      %s46 = sadd.s32 %s45, 1
      %p49 = scmp.eq.s32.totalorder %s11, 1
      %p50 = scmp.ne.s32.totalorder %s45, %s47
      %p51 = scmp.eq.s32.totalorder %s11, 0
      %p52 = por %p50, %p51
      %p53 = scmp.ne.s32.totalorder %s45, %s47
      %p54 = scmp.eq.s32.totalorder %s16, 1
      %p55 = por %p53, %p54
      %p56 = scmp.ne.s32.totalorder %s47, %s48
      %p57 = scmp.eq.s32.totalorder %s16, 0
      %p58 = por %p56, %p57
      %p59 = scmp.ne.s32.totalorder %s47, %s48
      %p60 = scmp.eq.s32.totalorder %s17, 1
      %p61 = por %p59, %p60
      %p63 = scmp.ne.s32.totalorder %s48, %s62
      %p64 = scmp.eq.s32.totalorder %s17, 0
      %p65 = por %p63, %p64
      %s66 = ssub.s32 %s11, %s18
      %p67 = scmp.eq.s32.totalorder %s66, 0
      %s69 = sadd.s32 %s68, 1
      %s70 = scalar_select %p67, %s68, %s69
      %p73 = pneg %p67
      %p74 = scmp.eq.s32.totalorder %s11, 1
      %p75 = por %p73, %p74
      %p76 = scmp.ne.s32.totalorder %s68, %s71
      %p77 = scmp.eq.s32.totalorder %s11, 0
      %p78 = por %p76, %p77
      %p79 = scmp.ne.s32.totalorder %s68, %s71
      %p80 = scmp.eq.s32.totalorder %s16, 1
      %p81 = por %p79, %p80
      %p82 = scmp.ne.s32.totalorder %s71, %s72
      %p83 = scmp.eq.s32.totalorder %s16, 0
      %p84 = por %p82, %p83
      %p85 = scmp.ne.s32.totalorder %s71, %s72
      %p86 = scmp.eq.s32.totalorder %s17, 1
      %p87 = por %p85, %p86
      %p89 = scmp.ne.s32.totalorder %s72, %s88
      %p90 = scmp.eq.s32.totalorder %s17, 0
      %p91 = por %p89, %p90
      %p92 = scmp.le.s32.totalorder 1, %s11
      %p93 = scmp.lt.s32.totalorder %s11, 3
      %p94 = pnand %p92, %p93
      %p95 = pneg %p94
      // Predicated region
      $region9: #{tpu_custom_call.1} parent=5 // pred_check
        _
      $region10: #{tpu_custom_call.1} parent=5 // pred_check_branch
        %97 = sbr.rel (%p94) target = $region12
      $region11: #{tpu_custom_call.1} parent=5 // pred_region
        %s98 = ssub.s32 %s11, 1
        // Predicated region
        $region13: #{tpu_custom_call.1} parent=11 // pred_check
          %p99 = pneg %p58
        $region14: #{tpu_custom_call.1} parent=11 // pred_check_branch
          %101 = sbr.rel (%p99) target = $region16
        $region15: #{tpu_custom_call.1} parent=11 // pred_region
          _
        $region16: #{tpu_custom_call.1} parent=11 // pred_fallthru
          _
      $region12: #{tpu_custom_call.1} parent=5 // pred_fallthru
        _
      %p102 = scmp.lt.s32.totalorder %s11, 2
      // Predicated region
      $region17: #{tpu_custom_call.1} parent=5 // pred_check
        %p103 = pneg %p102
      $region18: #{tpu_custom_call.1} parent=5 // pred_check_branch
        %105 = sbr.rel (%p103) target = $region20
      $region19: #{tpu_custom_call.1} parent=5 // pred_region
        // Predicated region
        $region21: #{tpu_custom_call.1} parent=19 // pred_check
          %p106 = pneg %p31
        $region22: #{tpu_custom_call.1} parent=19 // pred_check_branch
          %108 = sbr.rel (%p106) target = $region24
        $region23: #{tpu_custom_call.1} parent=19 // pred_region
          %p109 = scmp.lt.s32.totalorder %s11, 1
          %s110 = scalar_select %p109, %s11, 1
          %s111 = smul.addr %s110, 8
          %s112 = scalar_lea.vmem %s0, %s111
        $region24: #{tpu_custom_call.1} parent=19 // pred_fallthru
          _
      $region20: #{tpu_custom_call.1} parent=5 // pred_fallthru
        _
      %p113 = scmp.le.s32.totalorder 1, %s11
      %p114 = scmp.lt.s32.totalorder %s11, 3
      %p115 = pnand %p113, %p114
      %p116 = pneg %p115
      // Predicated region
      $region25: #{tpu_custom_call.1} parent=5 // pred_check
        _
      $region26: #{tpu_custom_call.1} parent=5 // pred_check_branch
        %118 = sbr.rel (%p115) target = $region28
      $region27: #{tpu_custom_call.1} parent=5 // pred_region
        %s119 = ssub.s32 %s11, 1
        %p120 = scmp.lt.s32.totalorder %s16, 1
        %s121 = scalar_select %p120, %s16, 1
        %s122 = smul.addr %s121, 8
        %s123 = scalar_lea.vmem %s0, %s122
        %p124 = pneg %p37
        %p125 = pneg %p34
        %p126 = pneg %p58
        %p127 = pneg %p55
        %p128 = pneg %p84
        %p129 = pneg %p81
        %s130 = sand.u32 %s71, 1
        %s131 = scalar_lea.sflag [#allocation3], %s130
        %s132 = sand.u32 %s71, 1
        %s133 = smul.addr %s132, 8
        %s134 = scalar_lea.vmem [#allocation2], %s133
        %p135 = scmp.lt.s32.totalorder %s16, 1
        %s136 = scalar_select %p135, %s16, 1
        %s137 = smul.addr %s136, 8
        %s138 = scalar_lea.vmem %s0, %s137
        %v139 = vld [vmem:[%s138] sm:$0xff]
        %v140 = vrot.slane %v139, 7
        %v141 = vrot.slane %v139, 1
        %143 = vrot.lane.b32.xlu0 %v139, 4
        %v144 = vpop.permute.xlu0 %143
        %147 = vrot.lane.b32.xlu0 %v141, 8
        %v148 = vpop.permute.xlu0 %147
        %vm150 = vcmask 31744
        %v151 = vsel %vm150, %v140, %v144
        %vm152 = vcmask 64512
        %v153 = vsel %vm152, %v151, %v148
        %v154 = vld [vmem:[%s1] sm:$0xff]
        %v155 = vld [vmem:[%s1 + $0x8] sm:$0xf]
        %vm156 = vcmask 97280
        %v158 = vsel %vm156, %v153, 0
        %vm160 = vcmask 1043456
        %v162 = vsel %vm160, %v155, 0
        %164 = vmatpush.msra.mxu0 0.0
        %165 = vmatpush.msra.mxu0 0.0
        %166 = vmatpush.msra.mxu0 0.0
        %167 = vmatpush.msra.mxu0 0.0
        %168 = vmatpush.msra.mxu0 0.0
        %169 = vmatpush.msra.mxu0 0.0
        %170 = vmatpush.msra.mxu0 0.0
        %171 = vmatpush.msra.mxu0 0.0
        %172 = vmatpush.msra.mxu0 0.0
        %173 = vmatpush.msra.mxu0 0.0
        %174 = vmatpush.msra.mxu0 0.0
        %175 = vmatpush.msra.mxu0 0.0
        %176 = vmatpush.msra.mxu0 0.0
        %177 = vmatpush.msra.mxu0 0.0
        %178 = vmatpush.msra.mxu0 %v162
        %179 = vmatpush.msra.mxu0 %v154
        %180 = vmatmul.f32.gmra.mxu0 %v158
        %v181 = vpop.f32.mrf.mxu0
        %v182 = vadd.f32 0.0, %v181
        %183 = vdwg.mxu0
        %vm184 = vcmask 261120
        %185 = vst.msk [vmem:[%s134] sm:$0xff] %vm184, %v182
        %s186 = sand.u32 %s71, 1
        %s187 = scalar_lea.sflag [#allocation3], %s186
        %s188 = sand.u32 %s71, 1
        %s189 = smul.addr %s188, 8
        %s190 = scalar_lea.vmem [#allocation2], %s189
        // Predicated region
        $region29: #{tpu_custom_call.1} parent=27 // pred_check
          %p191 = pneg %p81
        $region30: #{tpu_custom_call.1} parent=27 // pred_check_branch
          %193 = sbr.rel (%p191) target = $region32
        $region31: #{tpu_custom_call.1} parent=27 // pred_region
          %195 = vsyncadd %s187, 0
          %s196 = smul.addr %s16, 8
          %s197 = scalar_lea.hbm %s2, %s196
          %s199 = sshll.u32 %s190, 4
          %s200 = int_to_ptr.vmem [resolvable:$true] %s199
          %s201 = sshll.u32 %s197, 4
          %s202 = int_to_ptr.hbm [resolvable:$true] %s201
          %204 = dma.vmem_to_hbm [thread:$0]  %s200, 128, %s202, %s187
        $region32: #{tpu_custom_call.1} parent=27 // pred_fallthru
          _
      $region28: #{tpu_custom_call.1} parent=5 // pred_fallthru
        _
      %p205 = scmp.le.s32.totalorder 2, %s11
      // Predicated region
      $region33: #{tpu_custom_call.1} parent=5 // pred_check
        %p206 = pneg %p205
      $region34: #{tpu_custom_call.1} parent=5 // pred_check_branch
        %208 = sbr.rel (%p206) target = $region36
      $region35: #{tpu_custom_call.1} parent=5 // pred_region
        %s209 = ssub.s32 %s11, 2
        // Predicated region
        $region37: #{tpu_custom_call.1} parent=35 // pred_check
          %p210 = pneg %p87
        $region38: #{tpu_custom_call.1} parent=35 // pred_check_branch
          %212 = sbr.rel (%p210) target = $region40
        $region39: #{tpu_custom_call.1} parent=35 // pred_region
          %s213 = sand.u32 %s72, 1
          %s214 = scalar_lea.sflag [#allocation3], %s213
          %s215 = sand.u32 %s72, 1
          %s216 = smul.addr %s215, 8
          %s217 = scalar_lea.vmem [#allocation2], %s216
          %219 = dma.done %s214, 128
        $region40: #{tpu_custom_call.1} parent=35 // pred_fallthru
          _
      $region36: #{tpu_custom_call.1} parent=5 // pred_fallthru
        _
    $region6: #{tpu_custom_call.1} parent=1 // loop_footer
      %s15 = sadd.s32 1, %s11
    $region7: #{tpu_custom_call.1} parent=1 // loop_footer_branch
      %10 = sbr.rel target = $region3
    $region8: #{tpu_custom_call.1} parent=1 // loop_exit
      _
    %220 = vsyncpa [#allocation3], 1
    %s221 = scalar_lea.sflag [#allocation3], 1
    %222 = vsyncpa %s221, 1

</llo_original>
